<compile_context>
chip_gen: v7x
topology: tpu7x:2x2x1
jax: 0.10.0
libtpu: 0.0.40
codegen_flags: <defaults>
</compile_context>

<pallas_src>
import functools

import numpy as np
import jax
import jax.numpy as jnp
from jax.experimental import pallas as pl
from jax.experimental.pallas import tpu as pltpu


def _downsample1d_kernel(z_ref, w_ref, b_ref, o_ref, *, l_out, tb):
    z = z_ref[...]                                   # (TM, 2C), TM = tb * l_out
    c = o_ref.shape[-1]                              # C_out == C
    tm = z.shape[0]

    # x[2t-1] for every output row: previous row's odd half, shifted down by one row.
    # Row 0 of the block is always a sequence start (blocks are batch-aligned), so the
    # prepended zero row implements the conv's left zero-padding in-kernel.
    x_prev = jnp.concatenate(
        [jnp.zeros((1, c), z.dtype), z[:-1, c:]], axis=0)        # (TM, C)

    if tb > 1:
        # Interior batch boundaries inside the block (local row % l_out == 0) must also
        # see zero padding, not the previous batch's last sample.
        row = jax.lax.broadcasted_iota(jnp.int32, (tm, c), 0)
        x_prev = jnp.where((row % l_out) != 0, x_prev, jnp.zeros_like(x_prev))

    # [x[2t-1] | x[2t] | x[2t+1]]  @  [W0; W1; W2]  -- one wide MXU matmul, K = 3C.
    x_big = jnp.concatenate([x_prev, z], axis=-1)                # (TM, 3C)
    acc = jnp.dot(x_big, w_ref[...], preferred_element_type=jnp.float32)
    acc = acc + b_ref[...].astype(jnp.float32)                   # (1, C) broadcast
    o_ref[...] = acc.astype(o_ref.dtype)


def _pick_batches_per_step(batch, l_out, target_rows=512):
    """Batches per grid step. Rows per step = tb * l_out.

    Constraints: tb divides batch; the block's sublane count (tb * l_out) is a
    multiple of 8 or covers the whole M axis. Preferences: >=2 grid steps
    (v7x megacore), then the largest tile <= target_rows.
    """
    divs = [d for d in range(1, batch + 1) if batch % d == 0]
    ok = [d for d in divs if (d * l_out) % 8 == 0 or d == batch]

    def key(d):
        return (batch // d >= 2, d * l_out <= target_rows, d * l_out)

    return max(ok, key=key)


def downsample1d(x_ncl, weight, bias, *, target_rows=512):
    """Conv1d(dim, dim, 3, stride=2, padding=1) forward.

    x_ncl : (B, C, L) — PyTorch NCL layout, L even
    weight: (C_out, C_in, 3) — PyTorch Conv1d weight layout (C_out == C_in == C)
    bias  : (C_out,)
    returns (B, C, L // 2)
    """
    B, C, L = x_ncl.shape
    assert weight.shape == (C, C, 3) and bias.shape == (C,)
    assert L % 2 == 0, "Downsample1d kernel assumes an even input length"
    l_out = L // 2

    # NCL -> NLC (channels on lanes), then pack (x[2t], x[2t+1]) pairs along lanes and
    # fold the batch into the matmul M dimension (free reshape).
    x_nlc = jnp.transpose(x_ncl, (0, 2, 1))                      # (B, L, C)
    z = x_nlc.reshape(B * l_out, 2 * C)                          # (M, 2C)

    # Conv1d weight (C_out, C_in, K) -> stacked (3*C_in, C_out): row k*C+i, col o = w[o,i,k].
    w_big = jnp.transpose(weight, (2, 1, 0)).reshape(3 * C, C)
    b2 = bias.reshape(1, C)

    tb = _pick_batches_per_step(B, l_out, target_rows)
    tm = tb * l_out
    grid = (B // tb,)

    out = pl.pallas_call(
        functools.partial(_downsample1d_kernel, l_out=l_out, tb=tb),
        out_shape=jax.ShapeDtypeStruct((B * l_out, C), x_ncl.dtype),
        grid_spec=pltpu.PrefetchScalarGridSpec(
            num_scalar_prefetch=0,
            grid=grid,
            in_specs=[
                pl.BlockSpec((tm, 2 * C), lambda i: (i, 0)),     # activations tile
                pl.BlockSpec((3 * C, C), lambda i: (0, 0)),      # stacked weights (resident)
                pl.BlockSpec((1, C), lambda i: (0, 0)),          # bias (resident)
            ],
            out_specs=pl.BlockSpec((tm, C), lambda i: (i, 0)),
        ),
        compiler_params=pltpu.CompilerParams(
            dimension_semantics=("parallel",),
            vmem_limit_bytes=32 * 1024 * 1024,
        ),
    )(z, w_big, b2)

    # (B*L_out, C) -> (B, L_out, C) -> (B, C, L_out): layout glue only.
    return jnp.transpose(out.reshape(B, l_out, C), (0, 2, 1))


if __name__ == "__main__":
    key = jax.random.PRNGKey(0)
    k1, k2, k3 = jax.random.split(key, 3)

    B, C, L = 2, 128, 16                           # batch=2, dim=128, spatial=16
    x = jax.random.normal(k1, (B, C, L), jnp.float32)
    # PyTorch Conv1d weight layout: (C_out, C_in, K)
    weight = 0.1 * jax.random.normal(k2, (C, C, 3), jnp.float32)
    bias = 0.1 * jax.random.normal(k3, (C,), jnp.float32)

    y = downsample1d(x, weight, bias)
    y = jax.block_until_ready(y)
    assert y.shape == (B, C, L // 2)

    # Reference: XLA's convolution (cross-correlation, same semantics as nn.Conv1d).
    y_ref = jax.lax.conv_general_dilated(
        x, weight, window_strides=(2,), padding=((1, 1),),
        dimension_numbers=("NCH", "OIH", "NCH")) + bias[None, :, None]
    np.testing.assert_allclose(np.asarray(y), np.asarray(y_ref), rtol=1e-4, atol=1e-4)

    print("KERNEL_OK")
</pallas_src>

<mosaic_0001>
module attributes {stable_mosaic.version = 11 : i64} {
  func.func @_downsample1d_kernel(%arg0: i32, %arg1: memref<8x256xf32, #tpu.memory_space<vmem>>, %arg2: memref<384x128xf32, #tpu.memory_space<vmem>>, %arg3: memref<1x128xf32, #tpu.memory_space<vmem>>, %arg4: memref<8x128xf32, #tpu.memory_space<vmem>>) attributes {dimension_semantics = [#tpu.dimension_semantics<parallel>], iteration_bounds = array<i64: 2>, scalar_prefetch = 0 : i64, scratch_operands = 0 : i64, tpu.core_type = #tpu.core_type<tc>, window_params = [{transform_indices = @transform_0, window_bounds = array<i64: 8, 256>}, {pipeline_mode = #tpu.pipeline_mode<synchronous>, transform_indices = @transform_1, window_bounds = array<i64: 384, 128>}, {pipeline_mode = #tpu.pipeline_mode<synchronous>, transform_indices = @transform_2, window_bounds = array<i64: 1, 128>}, {transform_indices = @transform_3, window_bounds = array<i64: 8, 128>}]} {
    %c0 = arith.constant 0 : index
    %c0_0 = arith.constant 0 : index
    %0 = vector.load %arg1[%c0, %c0_0] : memref<8x256xf32, #tpu.memory_space<vmem>>, vector<8x256xf32>
    %cst = arith.constant 0.000000e+00 : f32
    %1 = vector.broadcast %cst : f32 to vector<1x128xf32>
    %2 = vector.extract_strided_slice %0 {offsets = [0, 128], sizes = [7, 128], strides = [1, 1]} : vector<8x256xf32> to vector<7x128xf32>
    %3 = tpu.concatenate %1, %2 in 0 : vector<1x128xf32>, vector<7x128xf32> -> vector<8x128xf32>
    %4 = tpu.concatenate %3, %0 in 1 : vector<8x128xf32>, vector<8x256xf32> -> vector<8x384xf32>
    %c0_1 = arith.constant 0 : index
    %c0_2 = arith.constant 0 : index
    %5 = vector.load %arg2[%c0_1, %c0_2] : memref<384x128xf32, #tpu.memory_space<vmem>>, vector<384x128xf32>
    %cst_3 = arith.constant dense<0.000000e+00> : vector<8x128xf32>
    %6 = tpu.matmul %4, %5, %cst_3 {dimension_numbers = #tpu.dot_dimension_numbers<[1], [0], [0], [1], [0, 0, 1, 1], [], []>} : vector<8x384xf32>, vector<384x128xf32>, vector<8x128xf32> -> vector<8x128xf32>
    %c0_4 = arith.constant 0 : index
    %c0_5 = arith.constant 0 : index
    %7 = vector.load %arg3[%c0_4, %c0_5] : memref<1x128xf32, #tpu.memory_space<vmem>>, vector<1x128xf32>
    %8 = vector.broadcast %7 : vector<1x128xf32> to vector<8x128xf32>
    %9 = arith.addf %6, %8 : vector<8x128xf32>
    %c0_6 = arith.constant 0 : index
    %c0_7 = arith.constant 0 : index
    %10 = vector.load %arg4[%c0_6, %c0_7] : memref<8x128xf32, #tpu.memory_space<vmem>>, vector<8x128xf32>
    tpu.vector_store %arg4[%c0_6, %c0_7], %9 {strides = array<i32>} : memref<8x128xf32, #tpu.memory_space<vmem>>, vector<8x128xf32>,
    return
  }
  func.func @transform_0(%arg0: i32) -> (i32, i32) {
    %c0_i32 = arith.constant 0 : i32
    %c0_i32_0 = arith.constant 0 : i32
    return %arg0, %c0_i32 : i32, i32
  }
  func.func @transform_1(%arg0: i32) -> (i32, i32) {
    %c0_i32 = arith.constant 0 : i32
    %c0_i32_0 = arith.constant 0 : i32
    %c0_i32_1 = arith.constant 0 : i32
    return %c0_i32, %c0_i32_0 : i32, i32
  }
  func.func @transform_2(%arg0: i32) -> (i32, i32) {
    %c0_i32 = arith.constant 0 : i32
    %c0_i32_0 = arith.constant 0 : i32
    %c0_i32_1 = arith.constant 0 : i32
    return %c0_i32, %c0_i32_0 : i32, i32
  }
  func.func @transform_3(%arg0: i32) -> (i32, i32) {
    %c0_i32 = arith.constant 0 : i32
    %c0_i32_0 = arith.constant 0 : i32
    return %arg0, %c0_i32 : i32, i32
  }
}

</mosaic_0001>

<llo_original>
// kernel: tpu_custom_call.1
$region0: #{tpu_custom_call.1}
  #allocation0 [shape = 'u32[]', space=smem, size = 0x4, offset = 0x4, fixed_abs, tag = 'smem constant byte address 0x4 - core index']
  #allocation1 [shape = 'u32[144,128]{1,0:T(1,128)}', space=vmem, size = 0x12000, scoped, tag = 'internal scratch']
  %s0 = inlined_call_operand.hbm [shape: f32[16,256], index: 0, kind: input, shape index: {}]
  %s1 = inlined_call_operand.hbm [shape: f32[384,128], index: 1, kind: input, shape index: {}]
  %s2 = inlined_call_operand.vmem [shape: f32[1,128], index: 2, kind: input, shape index: {}]
  %s3 = inlined_call_operand.hbm [shape: f32[16,128], index: 3, kind: output, shape index: {}]
  %s4 = sld [smem:[#allocation0]]
  $region53: #{tpu_custom_call.1} parent=0
    _
  %s6 = ssub.s32 1, %s4
  %s7 = scalar_select 0, %s6, %s4
  $region1: #{tpu_custom_call.1} parent=0
    #allocation2 [shape = 'u8[16384]{0}', space=vmem, size = 0x4000, scoped, tag = 'input window, operand 0']
    #allocation3 [shape = 's32[2]{0}', space=sflag, size = 0x8, scoped, tag = 'scoped memory for tpu_custom_call.1']
    #allocation4 [shape = 's32[2]{0}', space=sflag, size = 0x8, scoped, tag = 'scoped memory for tpu_custom_call.1']
    #allocation5 [shape = 'u8[196608]{0}', space=vmem, size = 0x30000, scoped, tag = 'input window, operand 1, single buffered']
    #allocation6 [shape = 's32[1]{0}', space=sflag, size = 0x4, scoped, tag = 'scoped memory for tpu_custom_call.1']
    #allocation7 [shape = 'u8[8192]{0}', space=vmem, size = 0x2000, scoped, tag = 'output window, operand 0']
    %8 = vsyncpa [#allocation3], 0
    %s9 = scalar_lea.sflag [#allocation3], 1
    %10 = vsyncpa %s9, 0
    %11 = vsyncpa [#allocation6], 0
    %12 = vsyncpa [#allocation4], 0
    %s13 = scalar_lea.sflag [#allocation4], 1
    %14 = vsyncpa %s13, 0
    loop: start=0, step=1, limit=4
    $region2: #{tpu_custom_call.1} parent=1 // loop_pre_header
      _
    $region3: #{tpu_custom_call.1} parent=1 // loop_header
      %s16 = sphi 0, %s20
      %p17 = scmp.ge.s32.totalorder %s16, 4
      %s26 = sphi 0, %s28
      %s29 = sphi 0, %s26
      %s30 = sphi 0, %s29
      %s46 = sphi 0, %s30
      %s50 = sphi 0, %s50
      %s52 = sphi 0, %s50
      %s53 = sphi 0, %s52
      %s67 = sphi 0, %s53
      %s71 = sphi 0, %s71
      %s73 = sphi 0, %s71
      %s74 = sphi 0, %s73
      %s88 = sphi 0, %s74
      %s94 = sphi 0, %s96
      %s97 = sphi 0, %s94
      %s98 = sphi 0, %s97
      %s114 = sphi 0, %s98
    $region4: #{tpu_custom_call.1} parent=1 // loop_header_branch
      %19 = sbr.rel (%p17) target = $region8
    $region5: #{tpu_custom_call.1} parent=1 // loop_body
      %s21 = ssub.s32 %s16, 1
      %s22 = ssub.s32 %s16, 2
      %s23 = sadd.s32 %s16, 1
      %s24 = ssub.s32 %s16, %s23
      %p25 = scmp.eq.s32.totalorder %s24, 0
      %s27 = sadd.s32 %s26, 1
      %s28 = scalar_select %p25, %s26, %s27
      %p31 = pneg %p25
      %p32 = scmp.eq.s32.totalorder %s16, 1
      %p33 = por %p31, %p32
      %p34 = scmp.ne.s32.totalorder %s26, %s29
      %p35 = scmp.eq.s32.totalorder %s16, 0
      %p36 = por %p34, %p35
      %p37 = scmp.ne.s32.totalorder %s26, %s29
      %p38 = scmp.eq.s32.totalorder %s21, 1
      %p39 = por %p37, %p38
      %p40 = scmp.ne.s32.totalorder %s29, %s30
      %p41 = scmp.eq.s32.totalorder %s21, 0
      %p42 = por %p40, %p41
      %p43 = scmp.ne.s32.totalorder %s29, %s30
      %p44 = scmp.eq.s32.totalorder %s22, 1
      %p45 = por %p43, %p44
      %p47 = scmp.ne.s32.totalorder %s30, %s46
      %p48 = scmp.eq.s32.totalorder %s22, 0
      %p49 = por %p47, %p48
      %s51 = sadd.s32 %s50, 1
      %p54 = scmp.eq.s32.totalorder %s16, 1
      %p55 = scmp.ne.s32.totalorder %s50, %s52
      %p56 = scmp.eq.s32.totalorder %s16, 0
      %p57 = por %p55, %p56
      %p58 = scmp.ne.s32.totalorder %s50, %s52
      %p59 = scmp.eq.s32.totalorder %s21, 1
      %p60 = por %p58, %p59
      %p61 = scmp.ne.s32.totalorder %s52, %s53
      %p62 = scmp.eq.s32.totalorder %s21, 0
      %p63 = por %p61, %p62
      %p64 = scmp.ne.s32.totalorder %s52, %s53
      %p65 = scmp.eq.s32.totalorder %s22, 1
      %p66 = por %p64, %p65
      %p68 = scmp.ne.s32.totalorder %s53, %s67
      %p69 = scmp.eq.s32.totalorder %s22, 0
      %p70 = por %p68, %p69
      %s72 = sadd.s32 %s71, 1
      %p75 = scmp.eq.s32.totalorder %s16, 1
      %p76 = scmp.ne.s32.totalorder %s71, %s73
      %p77 = scmp.eq.s32.totalorder %s16, 0
      %p78 = por %p76, %p77
      %p79 = scmp.ne.s32.totalorder %s71, %s73
      %p80 = scmp.eq.s32.totalorder %s21, 1
      %p81 = por %p79, %p80
      %p82 = scmp.ne.s32.totalorder %s73, %s74
      %p83 = scmp.eq.s32.totalorder %s21, 0
      %p84 = por %p82, %p83
      %p85 = scmp.ne.s32.totalorder %s73, %s74
      %p86 = scmp.eq.s32.totalorder %s22, 1
      %p87 = por %p85, %p86
      %p89 = scmp.ne.s32.totalorder %s74, %s88
      %p90 = scmp.eq.s32.totalorder %s22, 0
      %p91 = por %p89, %p90
      %s92 = ssub.s32 %s16, %s23
      %p93 = scmp.eq.s32.totalorder %s92, 0
      %s95 = sadd.s32 %s94, 1
      %s96 = scalar_select %p93, %s94, %s95
      %p99 = pneg %p93
      %p100 = scmp.eq.s32.totalorder %s16, 1
      %p101 = por %p99, %p100
      %p102 = scmp.ne.s32.totalorder %s94, %s97
      %p103 = scmp.eq.s32.totalorder %s16, 0
      %p104 = por %p102, %p103
      %p105 = scmp.ne.s32.totalorder %s94, %s97
      %p106 = scmp.eq.s32.totalorder %s21, 1
      %p107 = por %p105, %p106
      %p108 = scmp.ne.s32.totalorder %s97, %s98
      %p109 = scmp.eq.s32.totalorder %s21, 0
      %p110 = por %p108, %p109
      %p111 = scmp.ne.s32.totalorder %s97, %s98
      %p112 = scmp.eq.s32.totalorder %s22, 1
      %p113 = por %p111, %p112
      %p115 = scmp.ne.s32.totalorder %s98, %s114
      %p116 = scmp.eq.s32.totalorder %s22, 0
      %p117 = por %p115, %p116
      %p118 = scmp.le.s32.totalorder 1, %s16
      %p119 = scmp.lt.s32.totalorder %s16, 3
      %p120 = pnand %p118, %p119
      %p121 = pneg %p120
      // Predicated region
      $region9: #{tpu_custom_call.1} parent=5 // pred_check
        _
      $region10: #{tpu_custom_call.1} parent=5 // pred_check_branch
        %123 = sbr.rel (%p120) target = $region12
      $region11: #{tpu_custom_call.1} parent=5 // pred_region
        %s124 = ssub.s32 %s16, 1
        // Predicated region
        $region13: #{tpu_custom_call.1} parent=11 // pred_check
          %p125 = pneg %p63
        $region14: #{tpu_custom_call.1} parent=11 // pred_check_branch
          %127 = sbr.rel (%p125) target = $region16
        $region15: #{tpu_custom_call.1} parent=11 // pred_region
          %s129 = ssub.s32 6144, 6144
          %130 = vsyncadd [#allocation6], %s129
          %s131 = sshll.u32 [#allocation5], 4
          %s132 = int_to_ptr.vmem [resolvable:$true] %s131
          %137 = dma.hbm_to_vmem [thread:$0]  %s1, 6144, %s132, [#allocation6], 128, 128, 8
        $region16: #{tpu_custom_call.1} parent=11 // pred_fallthru
          _
        // Predicated region
        $region17: #{tpu_custom_call.1} parent=11 // pred_check
          %p138 = pneg %p84
        $region18: #{tpu_custom_call.1} parent=11 // pred_check_branch
          %140 = sbr.rel (%p138) target = $region20
        $region19: #{tpu_custom_call.1} parent=11 // pred_region
          _
        $region20: #{tpu_custom_call.1} parent=11 // pred_fallthru
          _
      $region12: #{tpu_custom_call.1} parent=5 // pred_fallthru
        _
      %p141 = scmp.lt.s32.totalorder %s16, 2
      // Predicated region
      $region21: #{tpu_custom_call.1} parent=5 // pred_check
        %p142 = pneg %p141
      $region22: #{tpu_custom_call.1} parent=5 // pred_check_branch
        %144 = sbr.rel (%p142) target = $region24
      $region23: #{tpu_custom_call.1} parent=5 // pred_region
        // Predicated region
        $region25: #{tpu_custom_call.1} parent=23 // pred_check
          %p145 = pneg %p36
        $region26: #{tpu_custom_call.1} parent=23 // pred_check_branch
          %147 = sbr.rel (%p145) target = $region28
        $region27: #{tpu_custom_call.1} parent=23 // pred_region
          %s148 = sand.u32 %s26, 1
          %s149 = scalar_lea.sflag [#allocation3], %s148
          %s150 = sand.u32 %s26, 1
          %s151 = smul.addr %s150, 16
          %s152 = scalar_lea.vmem [#allocation2], %s151
          %s154 = ssub.s32 256, 256
          %155 = vsyncadd %s149, %s154
          %s156 = smul.addr %s16, 2
          %s157 = smul.addr %s156, 128
          %s158 = scalar_lea.hbm %s0, %s157
          %s160 = sshll.u32 %s152, 4
          %s161 = int_to_ptr.vmem [resolvable:$true] %s160
          %163 = dma.hbm_to_vmem [thread:$0]  %s158, 256, %s161, %s149
        $region28: #{tpu_custom_call.1} parent=23 // pred_fallthru
          _
      $region24: #{tpu_custom_call.1} parent=5 // pred_fallthru
        _
      %p164 = scmp.le.s32.totalorder 1, %s16
      %p165 = scmp.lt.s32.totalorder %s16, 3
      %p166 = pnand %p164, %p165
      %p167 = pneg %p166
      // Predicated region
      $region29: #{tpu_custom_call.1} parent=5 // pred_check
        _
      $region30: #{tpu_custom_call.1} parent=5 // pred_check_branch
        %169 = sbr.rel (%p166) target = $region32
      $region31: #{tpu_custom_call.1} parent=5 // pred_region
        %s170 = ssub.s32 %s16, 1
        %s171 = sand.u32 %s29, 1
        %s172 = scalar_lea.sflag [#allocation3], %s171
        %s173 = sand.u32 %s29, 1
        %s174 = smul.addr %s173, 16
        %s175 = scalar_lea.vmem [#allocation2], %s174
        // Predicated region
        $region33: #{tpu_custom_call.1} parent=31 // pred_check
          %p176 = pneg %p42
        $region34: #{tpu_custom_call.1} parent=31 // pred_check_branch
          %178 = sbr.rel (%p176) target = $region36
        $region35: #{tpu_custom_call.1} parent=31 // pred_region
          %179 = dma.done %s172, 256
        $region36: #{tpu_custom_call.1} parent=31 // pred_fallthru
          _
        // Predicated region
        $region37: #{tpu_custom_call.1} parent=31 // pred_check
          %p180 = pneg %p63
        $region38: #{tpu_custom_call.1} parent=31 // pred_check_branch
          %182 = sbr.rel (%p180) target = $region40
        $region39: #{tpu_custom_call.1} parent=31 // pred_region
          %183 = dma.done [#allocation6], 6144
        $region40: #{tpu_custom_call.1} parent=31 // pred_fallthru
          _
        %s184 = sand.u32 %s29, 1
        %s185 = scalar_lea.sflag [#allocation3], %s184
        %s186 = sand.u32 %s29, 1
        %s187 = smul.addr %s186, 16
        %s188 = scalar_lea.vmem [#allocation2], %s187
        %p189 = pneg %p42
        %p190 = pneg %p39
        %p191 = pneg %p63
        %p192 = pneg %p60
        %p193 = pneg %p84
        %p194 = pneg %p81
        %p195 = pneg %p110
        %p196 = pneg %p107
        %s197 = sand.u32 %s97, 1
        %s198 = scalar_lea.sflag [#allocation4], %s197
        %s199 = sand.u32 %s97, 1
        %s200 = smul.addr %s199, 8
        %s201 = scalar_lea.vmem [#allocation7], %s200
        %v202 = vld [vmem:[%s175] sm:$0xff]
        %v203 = vld [vmem:[%s175 + $0x8] sm:$0xff]
        %v205 = vrot.slane %v203, 7
        %vm207 = vcmask 1040384
        %v208 = vsel %vm207, 0.0, %v205
        %v209 = vld [vmem:[#allocation5] sm:$0xff]
        %v210 = vld [vmem:[#allocation5 + $0x8] sm:$0xff]
        %v211 = vld [vmem:[#allocation5 + $0x10] sm:$0xff]
        %v212 = vld [vmem:[#allocation5 + $0x18] sm:$0xff]
        %v213 = vld [vmem:[#allocation5 + $0x20] sm:$0xff]
        %v214 = vld [vmem:[#allocation5 + $0x28] sm:$0xff]
        %v215 = vld [vmem:[#allocation5 + $0x30] sm:$0xff]
        %v216 = vld [vmem:[#allocation5 + $0x38] sm:$0xff]
        %v217 = vld [vmem:[#allocation5 + $0x40] sm:$0xff]
        %v218 = vld [vmem:[#allocation5 + $0x48] sm:$0xff]
        %v219 = vld [vmem:[#allocation5 + $0x50] sm:$0xff]
        %v220 = vld [vmem:[#allocation5 + $0x58] sm:$0xff]
        %v221 = vld [vmem:[#allocation5 + $0x60] sm:$0xff]
        %v222 = vld [vmem:[#allocation5 + $0x68] sm:$0xff]
        %v223 = vld [vmem:[#allocation5 + $0x70] sm:$0xff]
        %v224 = vld [vmem:[#allocation5 + $0x78] sm:$0xff]
        %v225 = vld [vmem:[#allocation5 + $0x80] sm:$0xff]
        %v226 = vld [vmem:[#allocation5 + $0x88] sm:$0xff]
        %v227 = vld [vmem:[#allocation5 + $0x90] sm:$0xff]
        %v228 = vld [vmem:[#allocation5 + $0x98] sm:$0xff]
        %v229 = vld [vmem:[#allocation5 + $0xa0] sm:$0xff]
        %v230 = vld [vmem:[#allocation5 + $0xa8] sm:$0xff]
        %v231 = vld [vmem:[#allocation5 + $0xb0] sm:$0xff]
        %v232 = vld [vmem:[#allocation5 + $0xb8] sm:$0xff]
        %v233 = vld [vmem:[#allocation5 + $0xc0] sm:$0xff]
        %v234 = vld [vmem:[#allocation5 + $0xc8] sm:$0xff]
        %v235 = vld [vmem:[#allocation5 + $0xd0] sm:$0xff]
        %v236 = vld [vmem:[#allocation5 + $0xd8] sm:$0xff]
        %v237 = vld [vmem:[#allocation5 + $0xe0] sm:$0xff]
        %v238 = vld [vmem:[#allocation5 + $0xe8] sm:$0xff]
        %v239 = vld [vmem:[#allocation5 + $0xf0] sm:$0xff]
        %v240 = vld [vmem:[#allocation5 + $0xf8] sm:$0xff]
        %v241 = vld [vmem:[#allocation5 + $0x100] sm:$0xff]
        %v242 = vld [vmem:[#allocation5 + $0x108] sm:$0xff]
        %v243 = vld [vmem:[#allocation5 + $0x110] sm:$0xff]
        %v244 = vld [vmem:[#allocation5 + $0x118] sm:$0xff]
        %v245 = vld [vmem:[#allocation5 + $0x120] sm:$0xff]
        %v246 = vld [vmem:[#allocation5 + $0x128] sm:$0xff]
        %v247 = vld [vmem:[#allocation5 + $0x130] sm:$0xff]
        %v248 = vld [vmem:[#allocation5 + $0x138] sm:$0xff]
        %v249 = vld [vmem:[#allocation5 + $0x140] sm:$0xff]
        %v250 = vld [vmem:[#allocation5 + $0x148] sm:$0xff]
        %v251 = vld [vmem:[#allocation5 + $0x150] sm:$0xff]
        %v252 = vld [vmem:[#allocation5 + $0x158] sm:$0xff]
        %v253 = vld [vmem:[#allocation5 + $0x160] sm:$0xff]
        %v254 = vld [vmem:[#allocation5 + $0x168] sm:$0xff]
        %v255 = vld [vmem:[#allocation5 + $0x170] sm:$0xff]
        %v256 = vld [vmem:[#allocation5 + $0x178] sm:$0xff]
        %v257 = vld [vmem:[%s2] sm:$0x1]
        %v259 = vlaneseq
        %v260 = vshrl.u32 %v259, 7
        %v261 = vsub.s32 0, %v260
        %v262 = vrot.slane %v257, %v261
        %264 = vmatprep.subr.mxu0 0.0
        %265 = vmatpush1.msra.mxu0 %v209
        %266 = vmatprep.subr.mxu0 0.0
        %267 = vmatpush1.msra.mxu0 %v210
        %268 = vmatprep.subr.mxu0 0.0
        %269 = vmatpush1.msra.mxu0 %v211
        %270 = vmatprep.subr.mxu0 0.0
        %271 = vmatpush1.msra.mxu0 %v212
        %272 = vmatprep.subr.mxu0 0.0
        %273 = vmatpush1.msra.mxu0 %v213
        %274 = vmatprep.subr.mxu0 0.0
        %275 = vmatpush1.msra.mxu0 %v214
        %276 = vmatprep.subr.mxu0 0.0
        %277 = vmatpush1.msra.mxu0 %v215
        %278 = vmatprep.subr.mxu0 0.0
        %279 = vmatpush1.msra.mxu0 %v216
        %280 = vmatprep.subr.mxu0 0.0
        %281 = vmatpush1.msra.mxu0 %v217
        %282 = vmatprep.subr.mxu0 0.0
        %283 = vmatpush1.msra.mxu0 %v218
        %284 = vmatprep.subr.mxu0 0.0
        %285 = vmatpush1.msra.mxu0 %v219
        %286 = vmatprep.subr.mxu0 0.0
        %287 = vmatpush1.msra.mxu0 %v220
        %288 = vmatprep.subr.mxu0 0.0
        %289 = vmatpush1.msra.mxu0 %v221
        %290 = vmatprep.subr.mxu0 0.0
        %291 = vmatpush1.msra.mxu0 %v222
        %292 = vmatprep.subr.mxu0 0.0
        %293 = vmatpush1.msra.mxu0 %v223
        %294 = vmatprep.subr.mxu0 0.0
        %295 = vmatpush1.msra.mxu0 %v224
        %296 = vmatprep.subr.mxu0 0.0
        %297 = vmatpush1.msra.mxu0 %v225
        %298 = vmatprep.subr.mxu0 0.0
        %299 = vmatpush1.msra.mxu0 %v226
        %300 = vmatprep.subr.mxu0 0.0
        %301 = vmatpush1.msra.mxu0 %v227
        %302 = vmatprep.subr.mxu0 0.0
        %303 = vmatpush1.msra.mxu0 %v228
        %304 = vmatprep.subr.mxu0 0.0
        %305 = vmatpush1.msra.mxu0 %v229
        %306 = vmatprep.subr.mxu0 0.0
        %307 = vmatpush1.msra.mxu0 %v230
        %308 = vmatprep.subr.mxu0 0.0
        %309 = vmatpush1.msra.mxu0 %v231
        %310 = vmatprep.subr.mxu0 0.0
        %311 = vmatpush1.msra.mxu0 %v232
        %312 = vmatprep.subr.mxu0 0.0
        %313 = vmatpush1.msra.mxu0 %v233
        %314 = vmatprep.subr.mxu0 0.0
        %315 = vmatpush1.msra.mxu0 %v234
        %316 = vmatprep.subr.mxu0 0.0
        %317 = vmatpush1.msra.mxu0 %v235
        %318 = vmatprep.subr.mxu0 0.0
        %319 = vmatpush1.msra.mxu0 %v236
        %320 = vmatprep.subr.mxu0 0.0
        %321 = vmatpush1.msra.mxu0 %v237
        %322 = vmatprep.subr.mxu0 0.0
        %323 = vmatpush1.msra.mxu0 %v238
        %324 = vmatprep.subr.mxu0 0.0
        %325 = vmatpush1.msra.mxu0 %v239
        %326 = vmatprep.subr.mxu0 0.0
        %327 = vmatpush1.msra.mxu0 %v240
        %328 = vmatprep.mubr.f32.mxu0 %v202
        %329 = vmatmul.mubr.f32.gmra.mrb[0].mxu0 %v208
        %v330 = vpop.f32.mrb[0].mxu0
        %v331 = vadd.f32 %v262, %v330
        %v332 = vpop.f32.mrb[0].mxu0
        %333 = vdwg.mxu0
        %334 = vmatprep.subr.mxu0 0.0
        %335 = vmatpush1.msra.mxu0 %v241
        %336 = vmatprep.subr.mxu0 0.0
        %337 = vmatpush1.msra.mxu0 %v242
        %338 = vmatprep.subr.mxu0 0.0
        %339 = vmatpush1.msra.mxu0 %v243
        %340 = vmatprep.subr.mxu0 0.0
        %341 = vmatpush1.msra.mxu0 %v244
        %342 = vmatprep.subr.mxu0 0.0
        %343 = vmatpush1.msra.mxu0 %v245
        %344 = vmatprep.subr.mxu0 0.0
        %345 = vmatpush1.msra.mxu0 %v246
        %346 = vmatprep.subr.mxu0 0.0
        %347 = vmatpush1.msra.mxu0 %v247
        %348 = vmatprep.subr.mxu0 0.0
        %349 = vmatpush1.msra.mxu0 %v248
        %350 = vmatprep.subr.mxu0 0.0
        %351 = vmatpush1.msra.mxu0 %v249
        %352 = vmatprep.subr.mxu0 0.0
        %353 = vmatpush1.msra.mxu0 %v250
        %354 = vmatprep.subr.mxu0 0.0
        %355 = vmatpush1.msra.mxu0 %v251
        %356 = vmatprep.subr.mxu0 0.0
        %357 = vmatpush1.msra.mxu0 %v252
        %358 = vmatprep.subr.mxu0 0.0
        %359 = vmatpush1.msra.mxu0 %v253
        %360 = vmatprep.subr.mxu0 0.0
        %361 = vmatpush1.msra.mxu0 %v254
        %362 = vmatprep.subr.mxu0 0.0
        %363 = vmatpush1.msra.mxu0 %v255
        %364 = vmatprep.subr.mxu0 0.0
        %365 = vmatpush1.msra.mxu0 %v256
        %366 = vmatprep.subr.mxu0 0.0
        %367 = vmatpush1.msra.mxu0 0.0
        %368 = vmatprep.subr.mxu0 0.0
        %369 = vmatpush1.msra.mxu0 0.0
        %370 = vmatprep.subr.mxu0 0.0
        %371 = vmatpush1.msra.mxu0 0.0
        %372 = vmatprep.subr.mxu0 0.0
        %373 = vmatpush1.msra.mxu0 0.0
        %374 = vmatprep.subr.mxu0 0.0
        %375 = vmatpush1.msra.mxu0 0.0
        %376 = vmatprep.subr.mxu0 0.0
        %377 = vmatpush1.msra.mxu0 0.0
        %378 = vmatprep.subr.mxu0 0.0
        %379 = vmatpush1.msra.mxu0 0.0
        %380 = vmatprep.subr.mxu0 0.0
        %381 = vmatpush1.msra.mxu0 0.0
        %382 = vmatprep.subr.mxu0 0.0
        %383 = vmatpush1.msra.mxu0 0.0
        %384 = vmatprep.subr.mxu0 0.0
        %385 = vmatpush1.msra.mxu0 0.0
        %386 = vmatprep.subr.mxu0 0.0
        %387 = vmatpush1.msra.mxu0 0.0
        %388 = vmatprep.subr.mxu0 0.0
        %389 = vmatpush1.msra.mxu0 0.0
        %390 = vmatprep.subr.mxu0 0.0
        %391 = vmatpush1.msra.mxu0 0.0
        %392 = vmatprep.subr.mxu0 0.0
        %393 = vmatpush1.msra.mxu0 0.0
        %394 = vmatprep.subr.mxu0 0.0
        %395 = vmatpush1.msra.mxu0 0.0
        %396 = vmatprep.subr.mxu0 0.0
        %397 = vmatpush1.msra.mxu0 0.0
        %398 = vmatprep.mubr.f32.mxu0 0.0
        %399 = vmatmul.mubr.f32.gmra.mrb[0].mxu0 %v203
        %v400 = vpop.f32.mrb[0].mxu0
        %v401 = vadd.f32 %v331, %v400
        %v402 = vpop.f32.mrb[0].mxu0
        %403 = vdwg.mxu0
        %404 = vst [vmem:[%s201] sm:$0xff] %v401
        %s405 = sand.u32 %s97, 1
        %s406 = scalar_lea.sflag [#allocation4], %s405
        %s407 = sand.u32 %s97, 1
        %s408 = smul.addr %s407, 8
        %s409 = scalar_lea.vmem [#allocation7], %s408
        // Predicated region
        $region41: #{tpu_custom_call.1} parent=31 // pred_check
          %p410 = pneg %p107
        $region42: #{tpu_custom_call.1} parent=31 // pred_check_branch
          %412 = sbr.rel (%p410) target = $region44
        $region43: #{tpu_custom_call.1} parent=31 // pred_region
          %s414 = ssub.s32 128, 128
          %415 = vsyncadd %s406, %s414
          %s416 = smul.addr %s21, 128
          %s417 = scalar_lea.hbm %s3, %s416
          %s419 = sshll.u32 %s409, 4
          %s420 = int_to_ptr.vmem [resolvable:$true] %s419
          %422 = dma.vmem_to_hbm [thread:$0]  %s420, 128, %s417, %s406
        $region44: #{tpu_custom_call.1} parent=31 // pred_fallthru
          _
      $region32: #{tpu_custom_call.1} parent=5 // pred_fallthru
        _
      %p423 = scmp.le.s32.totalorder 2, %s16
      // Predicated region
      $region45: #{tpu_custom_call.1} parent=5 // pred_check
        %p424 = pneg %p423
      $region46: #{tpu_custom_call.1} parent=5 // pred_check_branch
        %426 = sbr.rel (%p424) target = $region48
      $region47: #{tpu_custom_call.1} parent=5 // pred_region
        %s427 = ssub.s32 %s16, 2
        // Predicated region
        $region49: #{tpu_custom_call.1} parent=47 // pred_check
          %p428 = pneg %p113
        $region50: #{tpu_custom_call.1} parent=47 // pred_check_branch
          %430 = sbr.rel (%p428) target = $region52
        $region51: #{tpu_custom_call.1} parent=47 // pred_region
          %s431 = sand.u32 %s98, 1
          %s432 = scalar_lea.sflag [#allocation4], %s431
          %s433 = sand.u32 %s98, 1
          %s434 = smul.addr %s433, 8
          %s435 = scalar_lea.vmem [#allocation7], %s434
          %436 = dma.done %s432, 128
        $region52: #{tpu_custom_call.1} parent=47 // pred_fallthru
          _
      $region48: #{tpu_custom_call.1} parent=5 // pred_fallthru
        _
    $region6: #{tpu_custom_call.1} parent=1 // loop_footer
      %s20 = sadd.s32 1, %s16
    $region7: #{tpu_custom_call.1} parent=1 // loop_footer_branch
      %15 = sbr.rel target = $region3
    $region8: #{tpu_custom_call.1} parent=1 // loop_exit
      _
    %437 = vsyncpa [#allocation3], 1
    %s438 = scalar_lea.sflag [#allocation3], 1
    %439 = vsyncpa %s438, 1
    %440 = vsyncpa [#allocation6], 1
    %441 = vsyncpa [#allocation4], 1
    %s442 = scalar_lea.sflag [#allocation4], 1
    %443 = vsyncpa %s442, 1

</llo_original>
